<compile_context>
chip_gen: v6e
topology: v6e:2x2x1
jax: 0.10.0
libtpu: 0.0.40
codegen_flags: <defaults>
</compile_context>

<pallas_src>
import numpy as np
import jax
import jax.numpy as jnp
from jax.experimental import pallas as pl
from jax.experimental.pallas import tpu as pltpu


def _cdiv(a, b):
    return (a + b - 1) // b


def _round_up(x, m):
    return ((x + m - 1) // m) * m


# ----------------------------------------------------------------------------------------------
# Kernel
# ----------------------------------------------------------------------------------------------
def vqa_head_kernel(t_ref, v_ref, w_att_ref, b_att_ref, w_fus_ref, b_f_ref,
                    w_cls_ref, b_cls_ref, out_ref):
    f32 = jnp.float32
    t = t_ref[...]                           # (Bt, St, D), activation dtype (bf16 fast path)
    v = v_ref[...]                           # (Bt, Sv, D)
    w_att = w_att_ref[...]                   # (1, D) bf16  = Linear(D,1).weight
    b_att = b_att_ref[0, 0]                  # f32 scalar from SMEM
    St, D = t.shape[1], t.shape[2]

    # Per-token attention score = Linear(D,1)(tanh(x)).  tanh stays in the activation dtype
    # (bf16 EUP path on v6e/v7x; Mosaic upcasts transparently on v5e); the D-reduction and the
    # bias add accumulate in f32.
    score_t = jnp.sum((jnp.tanh(t) * w_att[None]).astype(f32), axis=-1) + b_att   # (Bt, St)
    score_v = jnp.sum((jnp.tanh(v) * w_att[None]).astype(f32), axis=-1) + b_att   # (Bt, Sv)

    # Fused softmax over the virtual concatenated token axis.  Only entries 0 and 1 of the
    # concatenation are consumed (torch: attention_weights[:, 0] / [:, 1]), so neither the
    # concatenation nor the full probability tensor is ever materialized.
    m = jnp.maximum(jnp.max(score_t, axis=1, keepdims=True),
                    jnp.max(score_v, axis=1, keepdims=True))                       # (Bt, 1)
    e_t = jnp.exp(score_t - m)                                                     # (Bt, St)
    e_v = jnp.exp(score_v - m)                                                     # (Bt, Sv)
    denom = (jnp.sum(e_t, axis=1, keepdims=True)
             + jnp.sum(e_v, axis=1, keepdims=True))                                # (Bt, 1)
    w0 = e_t[:, 0:1] / denom                     # prob of concat token 0 (1st text token)
    # prob of concat token 1: 2nd text token if St >= 2, else 1st image token — exact torch
    # semantics of attention_weights[:, 1] over the concatenated sequence.
    w1 = (e_t[:, 1:2] if St >= 2 else e_v[:, 0:1]) / denom

    # w is a per-row scalar gate, so sum_s(w * x) == w * sum_s(x).
    sum_t = jnp.sum(t.astype(f32), axis=1)                                         # (Bt, D)
    sum_v = jnp.sum(v.astype(f32), axis=1)                                         # (Bt, D)
    mm_dt = w_fus_ref.dtype                      # bf16: MXU-native on v5e/v6e/v7x
    at = (w0 * sum_t).astype(mm_dt)
    ai = (w1 * sum_v).astype(mm_dt)

    # fusion: Linear(2D -> D) on cat([at, ai]) + ReLU (+ Dropout = identity in eval).
    if D % 128 == 0:
        # lane-aligned: a single K=2D MXU push on the concatenated attended vector.
        fused = jnp.dot(jnp.concatenate([at, ai], axis=-1), w_fus_ref[...],
                        preferred_element_type=f32)
    else:
        # unaligned lane concat is risky/slow at small D -> two K=D dots on static ref slices.
        fused = (jnp.dot(at, w_fus_ref[pl.ds(0, D), :], preferred_element_type=f32)
                 + jnp.dot(ai, w_fus_ref[pl.ds(D, D), :], preferred_element_type=f32))
    fused = jnp.maximum(fused + b_f_ref[...], 0.0)                                 # (Bt, D)

    # classifier + log_softmax (f32 accumulate / bias).
    logits = jnp.dot(fused.astype(w_cls_ref.dtype), w_cls_ref[...],
                     preferred_element_type=f32) + b_cls_ref[...]                  # (Bt, L)
    mx = jnp.max(logits, axis=-1, keepdims=True)
    lse = mx + jnp.log(jnp.sum(jnp.exp(logits - mx), axis=-1, keepdims=True))
    out_ref[...] = (logits - lse).astype(out_ref.dtype)


# ----------------------------------------------------------------------------------------------
# Wrapper
# ----------------------------------------------------------------------------------------------
def prepare_params(params):
    """One-time weight cast/layout (cache and reuse: per-call casting around a bandwidth-bound
    kernel is pure overhead).  Matmul weights -> bf16 (MXU-native), biases stay f32."""
    f32, bf16 = jnp.float32, jnp.bfloat16
    return {
        "w_att": params["w_att"].astype(bf16).reshape(1, -1),        # Linear(D,1).weight
        "b_att": params["b_att"].astype(f32).reshape(1, 1),          # Linear(D,1).bias
        "w_fusion": params["w_fusion"].astype(bf16),                 # Linear(2D,D).weight.T
        "b_f": params["b_f"].astype(f32).reshape(1, -1),
        "w_cls": params["w_cls"].astype(bf16),                       # Linear(D,L).weight.T
        "b_cls": params["b_cls"].astype(f32).reshape(1, -1),
    }


def _vmem_capacity_bytes():
    try:
        return int(pltpu.get_tpu_info().vmem_capacity_bytes)
    except Exception:
        return 64 << 20        # conservative fallback = v7x per-TensorCore VMEM


def _plan_tiles(B, St, Sv, D, L, act_itemsize):
    """Generation-aware batch-tile / VMEM plan: fill ~80% of this chip's VMEM with the
    double-buffered activation tiles plus the single-copy resident weights."""
    cap = _vmem_capacity_bytes()
    budget = int(cap * 0.80)                       # 10-20% headroom for Pallas scratch/semaphores

    # resident single-buffered weights (bf16 matmul weights, f32 biases)
    weight_bytes = D * 2 + 2 * D * D * 2 + D * 4 + D * L * 2 + L * 4

    # per-batch-row working set: double-buffered input tiles + ~transient f32/bf16 copies of the
    # tile (tanh product / f32 upcast for the reductions) + the logits/output path.
    per_row = (St + Sv) * D * (2 * act_itemsize + 10) + L * 16 + 256

    bt = (budget - weight_bytes) // per_row
    bt = int(max(8, min(512, (bt // 8) * 8)))      # sublane-aligned, sane upper bound

    if bt >= B:
        # Whole batch fits one tile.  Keep >= 2 grid steps when the batch is big enough so
        # dimension_semantics=("parallel",) can shard tiles across v7x's two TensorCores.
        bt = B if B <= 8 else min(bt, _round_up(_cdiv(B, 2), 8))

    grid = _cdiv(B, bt)
    need = weight_bytes + bt * per_row + (4 << 20)
    vmem_limit = int(min(max(need, 32 << 20), int(cap * 0.90)))
    return bt, grid, vmem_limit, weight_bytes


def vqa_head(encoded_text, encoded_image, prepared):
    """Post-encoder VQA head.  encoded_text/encoded_image: [B, S, D] (bf16 or f32).
    `prepared` comes from prepare_params().  Returns log-probs [B, num_labels] in f32."""
    B, St, D = encoded_text.shape
    Bv, Sv, Dv = encoded_image.shape
    assert Bv == B and Dv == D
    L = prepared["w_cls"].shape[1]
    itemsize = jnp.dtype(encoded_text.dtype).itemsize

    bt, grid, vmem_limit, weight_bytes = _plan_tiles(B, St, Sv, D, L, itemsize)

    cost = pl.CostEstimate(
        flops=int(2 * B * ((St + Sv) * D + 2 * D * D + D * L)),
        transcendentals=int(B * ((St + Sv) * (D + 1) + L + 2)),
        bytes_accessed=int(B * (St + Sv) * D * itemsize + weight_bytes + B * L * 4),
    )

    return pl.pallas_call(
        vqa_head_kernel,
        out_shape=jax.ShapeDtypeStruct((B, L), jnp.float32),
        grid=(grid,),
        in_specs=[
            # activation tiles: full S/D dims (no wrapper padding), batch tiled & pipelined;
            # a non-dividing final batch tile is handled by Pallas partial blocks.
            pl.BlockSpec((bt, St, D), lambda i: (i, 0, 0)),           # encoded_text tile
            pl.BlockSpec((bt, Sv, D), lambda i: (i, 0, 0)),           # encoded_image tile
            # weights: whole-array VMEM residents (single copy, no per-step double buffering)
            pl.BlockSpec(memory_space=pltpu.MemorySpace.VMEM),        # attention weight (bf16)
            pl.BlockSpec(memory_space=pltpu.MemorySpace.SMEM),        # attention bias (f32 scalar)
            pl.BlockSpec(memory_space=pltpu.MemorySpace.VMEM),        # fusion weight (2D, D) bf16
            pl.BlockSpec(memory_space=pltpu.MemorySpace.VMEM),        # fusion bias (f32)
            pl.BlockSpec(memory_space=pltpu.MemorySpace.VMEM),        # classifier weight bf16
            pl.BlockSpec(memory_space=pltpu.MemorySpace.VMEM),        # classifier bias (f32)
        ],
        out_specs=pl.BlockSpec((bt, L), lambda i: (i, 0)),
        compiler_params=pltpu.CompilerParams(
            dimension_semantics=("parallel",),       # batch tiles shard across both TCs on v7x
            vmem_limit_bytes=vmem_limit),
        cost_estimate=cost,
    )(encoded_text, encoded_image,
      prepared["w_att"], prepared["b_att"], prepared["w_fusion"],
      prepared["b_f"], prepared["w_cls"], prepared["b_cls"])


# ----------------------------------------------------------------------------------------------
# Pure-JAX reference mirroring the PyTorch forward (no labels)
# ----------------------------------------------------------------------------------------------
def ref_forward(t, v, p):
    t = t.astype(jnp.float32)
    v = v.astype(jnp.float32)
    score_t = jnp.sum(jnp.tanh(t) * p["w_att"][None, :, :], axis=-1) + p["b_att"]
    score_v = jnp.sum(jnp.tanh(v) * p["w_att"][None, :, :], axis=-1) + p["b_att"]
    probs = jax.nn.softmax(jnp.concatenate([score_t, score_v], axis=1), axis=1)
    at = probs[:, 0:1] * jnp.sum(t, axis=1)
    ai = probs[:, 1:2] * jnp.sum(v, axis=1)
    fused = jnp.maximum(jnp.concatenate([at, ai], axis=-1) @ p["w_fusion"] + p["b_f"], 0.0)
    logits = fused @ p["w_cls"] + p["b_cls"]
    return jax.nn.log_softmax(logits, axis=-1)


if __name__ == "__main__":
    # Small shapes consistent with the module: intermediate_dims=D, num_labels=L.
    B, St, Sv, D, L = 2, 8, 8, 32, 16

    key = jax.random.PRNGKey(0)
    ks = jax.random.split(key, 8)
    scale = 0.1

    # Encoder outputs carried in bf16 (halves HBM traffic at real encoder shapes).
    encoded_text = jax.random.normal(ks[0], (B, St, D), jnp.float32).astype(jnp.bfloat16)
    encoded_image = jax.random.normal(ks[1], (B, Sv, D), jnp.float32).astype(jnp.bfloat16)

    params = {
        "w_att": jax.random.normal(ks[3], (1, D), jnp.float32) * scale,     # Linear(D,1).weight
        "b_att": jax.random.normal(ks[4], (1, 1), jnp.float32) * scale,     # Linear(D,1).bias
        "w_fusion": jax.random.normal(ks[2], (2 * D, D), jnp.float32) * scale,  # Linear(2D,D).weight.T
        "b_f": jax.random.normal(ks[5], (1, D), jnp.float32) * scale,
        "w_cls": jax.random.normal(ks[6], (D, L), jnp.float32) * scale,     # Linear(D,L).weight.T
        "b_cls": jax.random.normal(ks[7], (1, L), jnp.float32) * scale,
    }

    prepared = prepare_params(params)   # one-time bf16 cast / layout of the weights

    out = vqa_head(encoded_text, encoded_image, prepared)
    out = jax.block_until_ready(out)

    ref = ref_forward(encoded_text, encoded_image, params)
    # tolerance covers the bf16 tanh / bf16 MXU operand rounding (reference runs in f32)
    np.testing.assert_allclose(np.asarray(out), np.asarray(ref), rtol=2e-2, atol=2e-2)

    # TODO(synk): text/vision embedders, cross-modal encoder (string / image-path inputs via
    # external builders) and the optional CrossEntropyLoss(labels) branch are outside the kernel.
    print("KERNEL_OK")
</pallas_src>

<mosaic_0001>
module attributes {stable_mosaic.version = 11 : i64} {
  func.func @vqa_head_kernel(%arg0: i32, %arg1: memref<2x8x32xbf16, #tpu.memory_space<vmem>>, %arg2: memref<2x8x32xbf16, #tpu.memory_space<vmem>>, %arg3: memref<1x32xbf16, #tpu.memory_space<vmem>>, %arg4: memref<1x1xf32, #tpu.memory_space<smem>>, %arg5: memref<64x32xbf16, #tpu.memory_space<vmem>>, %arg6: memref<1x32xf32, #tpu.memory_space<vmem>>, %arg7: memref<32x16xbf16, #tpu.memory_space<vmem>>, %arg8: memref<1x16xf32, #tpu.memory_space<vmem>>, %arg9: memref<2x16xf32, #tpu.memory_space<vmem>>) attributes {dimension_semantics = [#tpu.dimension_semantics<parallel>], iteration_bounds = array<i64: 1>, scalar_prefetch = 0 : i64, scratch_operands = 0 : i64, tpu.core_type = #tpu.core_type<tc>, window_params = [{transform_indices = @transform_0, window_bounds = array<i64: 2, 8, 32>}, {transform_indices = @transform_1, window_bounds = array<i64: 2, 8, 32>}, {pipeline_mode = #tpu.pipeline_mode<synchronous>, transform_indices = @transform_2, window_bounds = array<i64: 1, 32>}, {transform_indices = @transform_3, window_bounds = array<i64: 1, 1>}, {pipeline_mode = #tpu.pipeline_mode<synchronous>, transform_indices = @transform_4, window_bounds = array<i64: 64, 32>}, {pipeline_mode = #tpu.pipeline_mode<synchronous>, transform_indices = @transform_5, window_bounds = array<i64: 1, 32>}, {pipeline_mode = #tpu.pipeline_mode<synchronous>, transform_indices = @transform_6, window_bounds = array<i64: 32, 16>}, {pipeline_mode = #tpu.pipeline_mode<synchronous>, transform_indices = @transform_7, window_bounds = array<i64: 1, 16>}, {transform_indices = @transform_8, window_bounds = array<i64: 2, 16>}]} {
    %c0 = arith.constant 0 : index
    %c0_0 = arith.constant 0 : index
    %c0_1 = arith.constant 0 : index
    %0 = vector.load %arg1[%c0, %c0_0, %c0_1] : memref<2x8x32xbf16, #tpu.memory_space<vmem>>, vector<2x8x32xbf16>
    %c0_2 = arith.constant 0 : index
    %c0_3 = arith.constant 0 : index
    %c0_4 = arith.constant 0 : index
    %1 = vector.load %arg2[%c0_2, %c0_3, %c0_4] : memref<2x8x32xbf16, #tpu.memory_space<vmem>>, vector<2x8x32xbf16>
    %c0_5 = arith.constant 0 : index
    %c0_6 = arith.constant 0 : index
    %2 = vector.load %arg3[%c0_5, %c0_6] : memref<1x32xbf16, #tpu.memory_space<vmem>>, vector<1x32xbf16>
    %c0_7 = arith.constant 0 : index
    %c0_8 = arith.constant 0 : index
    %3 = memref.load %arg4[%c0_7, %c0_8] : memref<1x1xf32, #tpu.memory_space<smem>>
    %4 = math.tanh %0 : vector<2x8x32xbf16>
    %5 = vector.shape_cast %2 : vector<1x32xbf16> to vector<1x1x32xbf16>
    %6 = vector.broadcast %5 : vector<1x1x32xbf16> to vector<2x8x32xbf16>
    %7 = arith.mulf %4, %6 : vector<2x8x32xbf16>
    %8 = arith.extf %7 : vector<2x8x32xbf16> to vector<2x8x32xf32>
    %cst = arith.constant dense<0.000000e+00> : vector<2x8xf32>
    %9 = vector.multi_reduction <add>, %8, %cst [2] : vector<2x8x32xf32> to vector<2x8xf32>
    %10 = vector.broadcast %3 : f32 to vector<2x8xf32>
    %11 = arith.addf %9, %10 : vector<2x8xf32>
    %12 = math.tanh %1 : vector<2x8x32xbf16>
    %13 = vector.shape_cast %2 : vector<1x32xbf16> to vector<1x1x32xbf16>
    %14 = vector.broadcast %13 : vector<1x1x32xbf16> to vector<2x8x32xbf16>
    %15 = arith.mulf %12, %14 : vector<2x8x32xbf16>
    %16 = arith.extf %15 : vector<2x8x32xbf16> to vector<2x8x32xf32>
    %cst_9 = arith.constant dense<0.000000e+00> : vector<2x8xf32>
    %17 = vector.multi_reduction <add>, %16, %cst_9 [2] : vector<2x8x32xf32> to vector<2x8xf32>
    %18 = vector.broadcast %3 : f32 to vector<2x8xf32>
    %19 = arith.addf %17, %18 : vector<2x8xf32>
    %cst_10 = arith.constant dense<0xFF800000> : vector<2xf32>
    %20 = vector.multi_reduction <maximumf>, %11, %cst_10 [1] : vector<2x8xf32> to vector<2xf32>
    %21 = vector.shape_cast %20 : vector<2xf32> to vector<2x1xf32>
    %cst_11 = arith.constant dense<0xFF800000> : vector<2xf32>
    %22 = vector.multi_reduction <maximumf>, %19, %cst_11 [1] : vector<2x8xf32> to vector<2xf32>
    %23 = vector.shape_cast %22 : vector<2xf32> to vector<2x1xf32>
    %24 = arith.maximumf %21, %23 : vector<2x1xf32>
    %25 = vector.broadcast %24 : vector<2x1xf32> to vector<2x8xf32>
    %26 = arith.subf %11, %25 : vector<2x8xf32>
    %27 = math.exp %26 : vector<2x8xf32>
    %28 = vector.broadcast %24 : vector<2x1xf32> to vector<2x8xf32>
    %29 = arith.subf %19, %28 : vector<2x8xf32>
    %30 = math.exp %29 : vector<2x8xf32>
    %cst_12 = arith.constant dense<0.000000e+00> : vector<2xf32>
    %31 = vector.multi_reduction <add>, %27, %cst_12 [1] : vector<2x8xf32> to vector<2xf32>
    %32 = vector.shape_cast %31 : vector<2xf32> to vector<2x1xf32>
    %cst_13 = arith.constant dense<0.000000e+00> : vector<2xf32>
    %33 = vector.multi_reduction <add>, %30, %cst_13 [1] : vector<2x8xf32> to vector<2xf32>
    %34 = vector.shape_cast %33 : vector<2xf32> to vector<2x1xf32>
    %35 = arith.addf %32, %34 : vector<2x1xf32>
    %36 = vector.extract_strided_slice %27 {offsets = [0, 0], sizes = [2, 1], strides = [1, 1]} : vector<2x8xf32> to vector<2x1xf32>
    %37 = arith.divf %36, %35 : vector<2x1xf32>
    %38 = vector.extract_strided_slice %27 {offsets = [0, 1], sizes = [2, 1], strides = [1, 1]} : vector<2x8xf32> to vector<2x1xf32>
    %39 = arith.divf %38, %35 : vector<2x1xf32>
    %40 = arith.extf %0 : vector<2x8x32xbf16> to vector<2x8x32xf32>
    %cst_14 = arith.constant dense<0.000000e+00> : vector<2x32xf32>
    %41 = vector.multi_reduction <add>, %40, %cst_14 [1] : vector<2x8x32xf32> to vector<2x32xf32>
    %42 = arith.extf %1 : vector<2x8x32xbf16> to vector<2x8x32xf32>
    %cst_15 = arith.constant dense<0.000000e+00> : vector<2x32xf32>
    %43 = vector.multi_reduction <add>, %42, %cst_15 [1] : vector<2x8x32xf32> to vector<2x32xf32>
    %44 = vector.broadcast %37 : vector<2x1xf32> to vector<2x32xf32>
    %45 = arith.mulf %44, %41 : vector<2x32xf32>
    %46 = arith.truncf %45 : vector<2x32xf32> to vector<2x32xbf16>
    %47 = vector.broadcast %39 : vector<2x1xf32> to vector<2x32xf32>
    %48 = arith.mulf %47, %43 : vector<2x32xf32>
    %49 = arith.truncf %48 : vector<2x32xf32> to vector<2x32xbf16>
    %c0_16 = arith.constant 0 : index
    %c0_17 = arith.constant 0 : index
    %50 = vector.load %arg5[%c0_16, %c0_17] : memref<64x32xbf16, #tpu.memory_space<vmem>>, vector<32x32xbf16>
    %cst_18 = arith.constant dense<0.000000e+00> : vector<2x32xf32>
    %51 = tpu.matmul %46, %50, %cst_18 {dimension_numbers = #tpu.dot_dimension_numbers<[1], [0], [0], [1], [0, 0, 1, 1], [], []>} : vector<2x32xbf16>, vector<32x32xbf16>, vector<2x32xf32> -> vector<2x32xf32>
    %c32 = arith.constant 32 : index
    %c0_19 = arith.constant 0 : index
    %52 = vector.load %arg5[%c32, %c0_19] : memref<64x32xbf16, #tpu.memory_space<vmem>>, vector<32x32xbf16>
    %cst_20 = arith.constant dense<0.000000e+00> : vector<2x32xf32>
    %53 = tpu.matmul %49, %52, %cst_20 {dimension_numbers = #tpu.dot_dimension_numbers<[1], [0], [0], [1], [0, 0, 1, 1], [], []>} : vector<2x32xbf16>, vector<32x32xbf16>, vector<2x32xf32> -> vector<2x32xf32>
    %54 = arith.addf %51, %53 : vector<2x32xf32>
    %c0_21 = arith.constant 0 : index
    %c0_22 = arith.constant 0 : index
    %55 = vector.load %arg6[%c0_21, %c0_22] : memref<1x32xf32, #tpu.memory_space<vmem>>, vector<1x32xf32>
    %56 = vector.broadcast %55 : vector<1x32xf32> to vector<2x32xf32>
    %57 = arith.addf %54, %56 : vector<2x32xf32>
    %cst_23 = arith.constant 0.000000e+00 : f32
    %58 = vector.broadcast %cst_23 : f32 to vector<2x32xf32>
    %59 = arith.maximumf %57, %58 : vector<2x32xf32>
    %60 = arith.truncf %59 : vector<2x32xf32> to vector<2x32xbf16>
    %c0_24 = arith.constant 0 : index
    %c0_25 = arith.constant 0 : index
    %61 = vector.load %arg7[%c0_24, %c0_25] : memref<32x16xbf16, #tpu.memory_space<vmem>>, vector<32x16xbf16>
    %cst_26 = arith.constant dense<0.000000e+00> : vector<2x16xf32>
    %62 = tpu.matmul %60, %61, %cst_26 {dimension_numbers = #tpu.dot_dimension_numbers<[1], [0], [0], [1], [0, 0, 1, 1], [], []>} : vector<2x32xbf16>, vector<32x16xbf16>, vector<2x16xf32> -> vector<2x16xf32>
    %c0_27 = arith.constant 0 : index
    %c0_28 = arith.constant 0 : index
    %63 = vector.load %arg8[%c0_27, %c0_28] : memref<1x16xf32, #tpu.memory_space<vmem>>, vector<1x16xf32>
    %64 = vector.broadcast %63 : vector<1x16xf32> to vector<2x16xf32>
    %65 = arith.addf %62, %64 : vector<2x16xf32>
    %cst_29 = arith.constant dense<0xFF800000> : vector<2xf32>
    %66 = vector.multi_reduction <maximumf>, %65, %cst_29 [1] : vector<2x16xf32> to vector<2xf32>
    %67 = vector.shape_cast %66 : vector<2xf32> to vector<2x1xf32>
    %68 = vector.broadcast %67 : vector<2x1xf32> to vector<2x16xf32>
    %69 = arith.subf %65, %68 : vector<2x16xf32>
    %70 = math.exp %69 : vector<2x16xf32>
    %cst_30 = arith.constant dense<0.000000e+00> : vector<2xf32>
    %71 = vector.multi_reduction <add>, %70, %cst_30 [1] : vector<2x16xf32> to vector<2xf32>
    %72 = vector.shape_cast %71 : vector<2xf32> to vector<2x1xf32>
    %73 = math.log %72 : vector<2x1xf32>
    %74 = arith.addf %67, %73 : vector<2x1xf32>
    %75 = vector.broadcast %74 : vector<2x1xf32> to vector<2x16xf32>
    %76 = arith.subf %65, %75 : vector<2x16xf32>
    %c0_31 = arith.constant 0 : index
    %c0_32 = arith.constant 0 : index
    %77 = vector.load %arg9[%c0_31, %c0_32] : memref<2x16xf32, #tpu.memory_space<vmem>>, vector<2x16xf32>
    tpu.vector_store %arg9[%c0_31, %c0_32], %76 {strides = array<i32>} : memref<2x16xf32, #tpu.memory_space<vmem>>, vector<2x16xf32>,
    return
  }
  func.func @transform_0(%arg0: i32) -> (i32, i32, i32) {
    %c0_i32 = arith.constant 0 : i32
    %c0_i32_0 = arith.constant 0 : i32
    %c0_i32_1 = arith.constant 0 : i32
    return %arg0, %c0_i32, %c0_i32_0 : i32, i32, i32
  }
  func.func @transform_1(%arg0: i32) -> (i32, i32, i32) {
    %c0_i32 = arith.constant 0 : i32
    %c0_i32_0 = arith.constant 0 : i32
    %c0_i32_1 = arith.constant 0 : i32
    return %arg0, %c0_i32, %c0_i32_0 : i32, i32, i32
  }
  func.func @transform_2(%arg0: i32) -> (i32, i32) {
    %c0_i32 = arith.constant 0 : i32
    %c0_i32_0 = arith.constant 0 : i32
    %c0_i32_1 = arith.constant 0 : i32
    return %c0_i32, %c0_i32_0 : i32, i32
  }
  func.func @transform_3(%arg0: i32) -> (i32, i32) {
    %c0_i32 = arith.constant 0 : i32
    %c0_i32_0 = arith.constant 0 : i32
    %c0_i32_1 = arith.constant 0 : i32
    return %c0_i32, %c0_i32_0 : i32, i32
  }
  func.func @transform_4(%arg0: i32) -> (i32, i32) {
    %c0_i32 = arith.constant 0 : i32
    %c0_i32_0 = arith.constant 0 : i32
    %c0_i32_1 = arith.constant 0 : i32
    return %c0_i32, %c0_i32_0 : i32, i32
  }
  func.func @transform_5(%arg0: i32) -> (i32, i32) {
    %c0_i32 = arith.constant 0 : i32
    %c0_i32_0 = arith.constant 0 : i32
    %c0_i32_1 = arith.constant 0 : i32
    return %c0_i32, %c0_i32_0 : i32, i32
  }
  func.func @transform_6(%arg0: i32) -> (i32, i32) {
    %c0_i32 = arith.constant 0 : i32
    %c0_i32_0 = arith.constant 0 : i32
    %c0_i32_1 = arith.constant 0 : i32
    return %c0_i32, %c0_i32_0 : i32, i32
  }
  func.func @transform_7(%arg0: i32) -> (i32, i32) {
    %c0_i32 = arith.constant 0 : i32
    %c0_i32_0 = arith.constant 0 : i32
    %c0_i32_1 = arith.constant 0 : i32
    return %c0_i32, %c0_i32_0 : i32, i32
  }
  func.func @transform_8(%arg0: i32) -> (i32, i32) {
    %c0_i32 = arith.constant 0 : i32
    %c0_i32_0 = arith.constant 0 : i32
    return %arg0, %c0_i32 : i32, i32
  }
}

</mosaic_0001>

<llo_original>
// kernel: tpu_custom_call.1
$region0: #{tpu_custom_call.1}
  #allocation0 [shape = 'u32[]', space=smem, size = 0x4, offset = 0x4, fixed_abs, tag = 'smem constant byte address 0x4 - core index']
  #allocation1 [shape = 'u32[144,128]{1,0:T(1,128)}', space=vmem, size = 0x12000, scoped, tag = 'internal scratch']
  #allocation2 [shape = 'f32[1,1]{1,0:T(1,128)S(6)}', space=smem, size = 0x200, scoped, tag = 'scoped memory for tpu_custom_call.1']
  %s0 = inlined_call_operand.vmem [shape: bf16[2,8,32], index: 0, kind: input, shape index: {}]
  %s1 = inlined_call_operand.vmem [shape: bf16[2,8,32], index: 1, kind: input, shape index: {}]
  %s2 = inlined_call_operand.vmem [shape: bf16[1,32], index: 2, kind: input, shape index: {}]
  %s3 = inlined_call_operand.<no memory space> [shape: f32[1,1], index: 3, kind: input, shape index: {}]
  %s4 = inlined_call_operand.vmem [shape: bf16[64,32], index: 4, kind: input, shape index: {}]
  %s5 = inlined_call_operand.vmem [shape: f32[1,32], index: 5, kind: input, shape index: {}]
  %s6 = inlined_call_operand.vmem [shape: bf16[32,16], index: 6, kind: input, shape index: {}]
  %s7 = inlined_call_operand.vmem [shape: f32[1,16], index: 7, kind: input, shape index: {}]
  %s8 = inlined_call_operand.hbm [shape: f32[2,16], index: 8, kind: output, shape index: {}]
  %s9 = sld [smem:[#allocation0]]
  $region42: #{tpu_custom_call.1} parent=0
    _
  %s11 = ssub.s32 1, %s9
  %s12 = scalar_select 0, %s11, %s9
  %13 = sst [smem:[#allocation2]] %s3
  $region1: #{tpu_custom_call.1} parent=0
    #allocation3 [shape = 'u8[1024]{0}', space=vmem, size = 0x400, scoped, tag = 'output window, operand 0, single buffered']
    #allocation4 [shape = 's32[1]{0}', space=sflag, size = 0x4, scoped, tag = 'scoped memory for tpu_custom_call.1']
    %14 = vsyncpa [#allocation4], 0
    // Predicated region
    $region2: #{tpu_custom_call.1} parent=1 // pred_check
      _
    $region3: #{tpu_custom_call.1} parent=1 // pred_check_branch
      %16 = sbr.rel (0) target = $region5
    $region4: #{tpu_custom_call.1} parent=1 // pred_region
      _
    $region5: #{tpu_custom_call.1} parent=1 // pred_fallthru
      _
    // Predicated region
    $region6: #{tpu_custom_call.1} parent=1 // pred_check
      _
    $region7: #{tpu_custom_call.1} parent=1 // pred_check_branch
      %18 = sbr.rel (0) target = $region9
    $region8: #{tpu_custom_call.1} parent=1 // pred_region
      _
    $region9: #{tpu_custom_call.1} parent=1 // pred_fallthru
      _
    // Predicated region
    $region10: #{tpu_custom_call.1} parent=1 // pred_check
      _
    $region11: #{tpu_custom_call.1} parent=1 // pred_check_branch
      %20 = sbr.rel (0) target = $region13
    $region12: #{tpu_custom_call.1} parent=1 // pred_region
      _
    $region13: #{tpu_custom_call.1} parent=1 // pred_fallthru
      _
    // Predicated region
    $region14: #{tpu_custom_call.1} parent=1 // pred_check
      _
    $region15: #{tpu_custom_call.1} parent=1 // pred_check_branch
      %22 = sbr.rel (0) target = $region17
    $region16: #{tpu_custom_call.1} parent=1 // pred_region
      _
    $region17: #{tpu_custom_call.1} parent=1 // pred_fallthru
      _
    // Predicated region
    $region18: #{tpu_custom_call.1} parent=1 // pred_check
      _
    $region19: #{tpu_custom_call.1} parent=1 // pred_check_branch
      %24 = sbr.rel (0) target = $region21
    $region20: #{tpu_custom_call.1} parent=1 // pred_region
      _
    $region21: #{tpu_custom_call.1} parent=1 // pred_fallthru
      _
    // Predicated region
    $region22: #{tpu_custom_call.1} parent=1 // pred_check
      _
    $region23: #{tpu_custom_call.1} parent=1 // pred_check_branch
      %26 = sbr.rel (0) target = $region25
    $region24: #{tpu_custom_call.1} parent=1 // pred_region
      _
    $region25: #{tpu_custom_call.1} parent=1 // pred_fallthru
      _
    // Predicated region
    $region26: #{tpu_custom_call.1} parent=1 // pred_check
      _
    $region27: #{tpu_custom_call.1} parent=1 // pred_check_branch
      %28 = sbr.rel (0) target = $region29
    $region28: #{tpu_custom_call.1} parent=1 // pred_region
      _
    $region29: #{tpu_custom_call.1} parent=1 // pred_fallthru
      _
    // Predicated region
    $region30: #{tpu_custom_call.1} parent=1 // pred_check
      _
    $region31: #{tpu_custom_call.1} parent=1 // pred_check_branch
      %30 = sbr.rel (0) target = $region33
    $region32: #{tpu_custom_call.1} parent=1 // pred_region
      _
    $region33: #{tpu_custom_call.1} parent=1 // pred_fallthru
      _
    %v32 = vld [vmem:[%s0] sm:$0xf]
    %v33 = vld [vmem:[%s0 + $0x4] sm:$0xf]
    %v34 = vld [vmem:[%s1] sm:$0xf]
    %v35 = vld [vmem:[%s1 + $0x4] sm:$0xf]
    %v36 = vld [vmem:[%s2] sm:$0x1]
    %s37 = sld [smem:[#allocation2]]
    %v38 = vtanh.bf16.pop %v32
    %v39 = vtanh.bf16.pop %v33
    %v41 = vpack.i.b16 %v36, %v36
    %v43 = vlaneseq
    %v44 = vshrl.u32 %v43, 7
    %v45 = vsub.s32 0, %v44
    %v46 = vrot.slane %v41, %v45
    %v47 = vmul.bf16 %v38, %v46
    %v48 = vmul.bf16 %v39, %v46
    %v49 = vunpack.c.l.bf16 %v47
    %v50 = vunpack.c.l.bf16 %v48
    %vm51 = vcmask 261120
    %v52 = vsel %vm51, %v49, 0.0
    %53 = vadd.xlane.f32.xlu0 %v52
    %v54 = vpop.xlane.xlu0 %53
    %v55 = vsel %vm51, %v50, 0.0
    %56 = vadd.xlane.f32.xlu0 %v55
    %v57 = vpop.xlane.xlu0 %56
    %v58 = vstv %s37
    %v59 = vadd.f32 %v54, %v58
    %v60 = vadd.f32 %v57, %v58
    %v61 = vtanh.bf16.pop %v34
    %v62 = vtanh.bf16.pop %v35
    %v63 = vmul.bf16 %v61, %v46
    %v64 = vmul.bf16 %v62, %v46
    %v65 = vunpack.c.l.bf16 %v63
    %v66 = vunpack.c.l.bf16 %v64
    %v67 = vsel %vm51, %v65, 0.0
    %68 = vadd.xlane.f32.xlu0 %v67
    %v69 = vpop.xlane.xlu0 %68
    %v70 = vsel %vm51, %v66, 0.0
    %71 = vadd.xlane.f32.xlu0 %v70
    %v72 = vpop.xlane.xlu0 %71
    %v73 = vadd.f32 %v69, %v58
    %v74 = vadd.f32 %v72, %v58
    %v77 = vlaneseq
    %v78 = vand.u32 %v77, 127
    %v79 = vlaneseq
    %v80 = vshrl.u32 %v79, 7
    %v81 = vsub.s32 %v78, %v80
    %v82 = vrot.slane %v59, %v81
    %v83 = vlaneseq
    %v84 = vshrl.u32 %v83, 7
    %v85 = vsub.s32 %v78, %v84
    %v86 = vrot.slane %v60, %v85
    %vm87 = vcmask 1041409
    %v88 = vsel %vm87, %v86, %v82
    %vm90 = vcmask 58368
    %v91 = vsel %vm90, %v88, -inf
    %92 = vmax.xlane.f32.xlu0 %v91
    %v93 = vpop.xlane.xlu0 %92
    %v96 = vlaneseq
    %v97 = vshrl.u32 %v96, 7
    %v98 = vsub.s32 %v78, %v97
    %v99 = vrot.slane %v73, %v98
    %v100 = vlaneseq
    %v101 = vshrl.u32 %v100, 7
    %v102 = vsub.s32 %v78, %v101
    %v103 = vrot.slane %v74, %v102
    %v104 = vsel %vm87, %v103, %v99
    %v106 = vsel %vm90, %v104, -inf
    %107 = vmax.xlane.f32.xlu0 %v106
    %v108 = vpop.xlane.xlu0 %107
    %v109 = vmax.f32 %v93, %v108
    %v111 = vlaneseq
    %v112 = vshrl.u32 %v111, 7
    %v113 = vsub.s32 0, %v112
    %v114 = vrot.slane %v109, %v113
    %v115 = vlaneseq
    %v116 = vshrl.u32 %v115, 7
    %v117 = vsub.s32 1, %v116
    %v118 = vrot.slane %v109, %v117
    %v121 = vsub.f32 %v59, %v114
    %v122 = vsub.f32 %v60, %v118
    %v123 = vmul.f32 %v121, 1.442695
    %v124 = vpow.pop %v123
    %v125 = vmul.f32 %v122, 1.442695
    %v126 = vpow.pop %v125
    %v127 = vsub.f32 %v73, %v114
    %v128 = vsub.f32 %v74, %v118
    %v129 = vmul.f32 %v127, 1.442695
    %v130 = vpow.pop %v129
    %v131 = vmul.f32 %v128, 1.442695
    %v132 = vpow.pop %v131
    %135 = vset.pattern.permute.xlu0 0
    %136 = vperm.xlu0 %135, %v124
    %v137 = vpop.permute.xlu0 %136
    %138 = vset.pattern.permute.xlu0 0
    %139 = vperm.xlu0 %138, %v126
    %v140 = vpop.permute.xlu0 %139
    %v141 = vlaneseq
    %v142 = vshrl.u32 %v141, 7
    %v143 = vsub.s32 %v78, %v142
    %v144 = vrot.slane %v137, %v143
    %v145 = vlaneseq
    %v146 = vshrl.u32 %v145, 7
    %v147 = vsub.s32 %v78, %v146
    %v148 = vrot.slane %v140, %v147
    %v149 = vsel %vm87, %v148, %v144
    %v151 = vsel %vm90, %v149, 0.0
    %152 = vadd.xlane.f32.xlu0 %v151
    %v153 = vpop.xlane.xlu0 %152
    %156 = vset.pattern.permute.xlu0 0
    %157 = vperm.xlu0 %156, %v130
    %v158 = vpop.permute.xlu0 %157
    %159 = vset.pattern.permute.xlu0 0
    %160 = vperm.xlu0 %159, %v132
    %v161 = vpop.permute.xlu0 %160
    %v162 = vlaneseq
    %v163 = vshrl.u32 %v162, 7
    %v164 = vsub.s32 %v78, %v163
    %v165 = vrot.slane %v158, %v164
    %v166 = vlaneseq
    %v167 = vshrl.u32 %v166, 7
    %v168 = vsub.s32 %v78, %v167
    %v169 = vrot.slane %v161, %v168
    %v170 = vsel %vm87, %v169, %v165
    %v172 = vsel %vm90, %v170, 0.0
    %173 = vadd.xlane.f32.xlu0 %v172
    %v174 = vpop.xlane.xlu0 %173
    %v175 = vadd.f32 %v153, %v174
    %v177 = vlaneseq
    %v178 = vshrl.u32 %v177, 7
    %v179 = vsub.s32 0, %v178
    %v180 = vrot.slane %v175, %v179
    %v181 = vlaneseq
    %v182 = vshrl.u32 %v181, 7
    %v183 = vsub.s32 1, %v182
    %v184 = vrot.slane %v175, %v183
    %v187 = vrcp.pop %v180
    %v188 = vmul.f32 %v124, %v187
    %v189 = vrcp.pop %v184
    %v190 = vmul.f32 %v126, %v189
    %v191 = vunpack.c.l.bf16 %v32
    %v192 = vunpack.c.l.bf16 %v33
    %v193 = vsel %vm51, %v191, 0.0
    %v194 = vrot.slane %v193, 4
    %v195 = vadd.f32 %v193, %v194
    %v196 = vrot.slane %v195, 2
    %v197 = vadd.f32 %v195, %v196
    %v198 = vrot.slane %v197, 1
    %v199 = vadd.f32 %v197, %v198
    %v200 = vsel %vm51, %v192, 0.0
    %v201 = vrot.slane %v200, 4
    %v202 = vadd.f32 %v200, %v201
    %v203 = vrot.slane %v202, 2
    %v204 = vadd.f32 %v202, %v203
    %v205 = vrot.slane %v204, 1
    %v206 = vadd.f32 %v204, %v205
    %v207 = vunpack.c.l.bf16 %v34
    %v208 = vunpack.c.l.bf16 %v35
    %v209 = vsel %vm51, %v207, 0.0
    %v210 = vrot.slane %v209, 4
    %v211 = vadd.f32 %v209, %v210
    %v212 = vrot.slane %v211, 2
    %v213 = vadd.f32 %v211, %v212
    %v214 = vrot.slane %v213, 1
    %v215 = vadd.f32 %v213, %v214
    %v216 = vsel %vm51, %v208, 0.0
    %v217 = vrot.slane %v216, 4
    %v218 = vadd.f32 %v216, %v217
    %v219 = vrot.slane %v218, 2
    %v220 = vadd.f32 %v218, %v219
    %v221 = vrot.slane %v220, 1
    %v222 = vadd.f32 %v220, %v221
    %v223 = vlaneseq
    %v224 = vshrl.u32 %v223, 7
    %v225 = vsub.s32 0, %v224
    %v226 = vrot.slane %v188, %v225
    %v227 = vlaneseq
    %v228 = vshrl.u32 %v227, 7
    %v229 = vsub.s32 0, %v228
    %v230 = vrot.slane %v190, %v229
    %234 = vbcast.lane.b32.xlu0 %v199, 256
    %v235 = vpop.permute.xlu0 %234
    %s237 = sor.u32 256, 8
    %238 = vbcast.lane.b32.xlu0 %v199, %s237
    %v239 = vpop.permute.xlu0 %238
    %s241 = sor.u32 256, 16
    %242 = vbcast.lane.b32.xlu0 %v199, %s241
    %v243 = vpop.permute.xlu0 %242
    %s245 = sor.u32 256, 24
    %246 = vbcast.lane.b32.xlu0 %v199, %s245
    %v247 = vpop.permute.xlu0 %246
    %249 = vbcast.lane.b32.xlu0 %v206, 256
    %v250 = vpop.permute.xlu0 %249
    %s252 = sor.u32 256, 8
    %253 = vbcast.lane.b32.xlu0 %v206, %s252
    %v254 = vpop.permute.xlu0 %253
    %s256 = sor.u32 256, 16
    %257 = vbcast.lane.b32.xlu0 %v206, %s256
    %v258 = vpop.permute.xlu0 %257
    %s260 = sor.u32 256, 24
    %261 = vbcast.lane.b32.xlu0 %v206, %s260
    %v262 = vpop.permute.xlu0 %261
    %v271 = vmul.f32 %v226, %v235
    %v272 = vmul.f32 %v226, %v239
    %v273 = vmul.f32 %v226, %v243
    %v274 = vmul.f32 %v226, %v247
    %v275 = vmul.f32 %v230, %v250
    %v276 = vmul.f32 %v230, %v254
    %v277 = vmul.f32 %v230, %v258
    %v278 = vmul.f32 %v230, %v262
    %v279 = vpack.c.bf16 %v272, %v271
    %v280 = vpack.c.bf16 %v274, %v273
    %v281 = vpack.c.bf16 %v276, %v275
    %v282 = vpack.c.bf16 %v278, %v277
    %v283 = vlaneseq
    %v284 = vshrl.u32 %v283, 7
    %v285 = vsub.s32 1, %v284
    %v286 = vrot.slane %v188, %v285
    %v287 = vlaneseq
    %v288 = vshrl.u32 %v287, 7
    %v289 = vsub.s32 1, %v288
    %v290 = vrot.slane %v190, %v289
    %294 = vbcast.lane.b32.xlu0 %v215, 256
    %v295 = vpop.permute.xlu0 %294
    %s297 = sor.u32 256, 8
    %298 = vbcast.lane.b32.xlu0 %v215, %s297
    %v299 = vpop.permute.xlu0 %298
    %s301 = sor.u32 256, 16
    %302 = vbcast.lane.b32.xlu0 %v215, %s301
    %v303 = vpop.permute.xlu0 %302
    %s305 = sor.u32 256, 24
    %306 = vbcast.lane.b32.xlu0 %v215, %s305
    %v307 = vpop.permute.xlu0 %306
    %309 = vbcast.lane.b32.xlu0 %v222, 256
    %v310 = vpop.permute.xlu0 %309
    %s312 = sor.u32 256, 8
    %313 = vbcast.lane.b32.xlu0 %v222, %s312
    %v314 = vpop.permute.xlu0 %313
    %s316 = sor.u32 256, 16
    %317 = vbcast.lane.b32.xlu0 %v222, %s316
    %v318 = vpop.permute.xlu0 %317
    %s320 = sor.u32 256, 24
    %321 = vbcast.lane.b32.xlu0 %v222, %s320
    %v322 = vpop.permute.xlu0 %321
    %v331 = vmul.f32 %v286, %v295
    %v332 = vmul.f32 %v286, %v299
    %v333 = vmul.f32 %v286, %v303
    %v334 = vmul.f32 %v286, %v307
    %v335 = vmul.f32 %v290, %v310
    %v336 = vmul.f32 %v290, %v314
    %v337 = vmul.f32 %v290, %v318
    %v338 = vmul.f32 %v290, %v322
    %v339 = vpack.c.bf16 %v332, %v331
    %v340 = vpack.c.bf16 %v334, %v333
    %v341 = vpack.c.bf16 %v336, %v335
    %v342 = vpack.c.bf16 %v338, %v337
    %v343 = vld [vmem:[%s4] sm:$0xf]
    %v344 = vld [vmem:[%s4 + $0x4] sm:$0xf]
    %v345 = vld [vmem:[%s4 + $0x8] sm:$0xf]
    %v346 = vld [vmem:[%s4 + $0xc] sm:$0xf]
    %v347 = vld [vmem:[%s4 + $0x10] sm:$0xf]
    %v348 = vld [vmem:[%s4 + $0x14] sm:$0xf]
    %v349 = vld [vmem:[%s4 + $0x18] sm:$0xf]
    %v350 = vld [vmem:[%s4 + $0x1c] sm:$0xf]
    %v355 = vunpack.c.l.b16 %v339
    %v356 = vunpack.c.h.b16 %v339
    %v357 = vunpack.c.l.b16 %v340
    %v358 = vunpack.c.h.b16 %v340
    %v359 = vunpack.c.l.b16 %v341
    %v360 = vunpack.c.h.b16 %v341
    %v361 = vunpack.c.l.b16 %v342
    %v362 = vunpack.c.h.b16 %v342
    %363 = vset.pattern.permute.xlu0 0
    %364 = vperm.xlu0 %363, %v355
    %v365 = vpop.permute.xlu0 %364
    %366 = vset.pattern.permute.xlu0 0
    %367 = vperm.xlu0 %366, %v356
    %v368 = vpop.permute.xlu0 %367
    %369 = vset.pattern.permute.xlu0 0
    %370 = vperm.xlu0 %369, %v357
    %v371 = vpop.permute.xlu0 %370
    %372 = vset.pattern.permute.xlu0 0
    %373 = vperm.xlu0 %372, %v358
    %v374 = vpop.permute.xlu0 %373
    %375 = vset.pattern.permute.xlu0 0
    %376 = vperm.xlu0 %375, %v359
    %v377 = vpop.permute.xlu0 %376
    %378 = vset.pattern.permute.xlu0 0
    %379 = vperm.xlu0 %378, %v360
    %v380 = vpop.permute.xlu0 %379
    %381 = vset.pattern.permute.xlu0 0
    %382 = vperm.xlu0 %381, %v361
    %v383 = vpop.permute.xlu0 %382
    %384 = vset.pattern.permute.xlu0 0
    %385 = vperm.xlu0 %384, %v362
    %v386 = vpop.permute.xlu0 %385
    %v387 = vlaneseq
    %v388 = vshrl.u32 %v387, 7
    %v389 = vsub.s32 %v78, %v388
    %v390 = vrot.slane %v365, %v389
    %v391 = vadd.s32 %v78, 4294967288
    %v392 = vlaneseq
    %v393 = vshrl.u32 %v392, 7
    %v394 = vsub.s32 %v391, %v393
    %v395 = vrot.slane %v368, %v394
    %vm396 = vcmask 130112
    %v397 = vsel %vm396, %v395, %v390
    %v398 = vadd.s32 %v78, 4294967280
    %v399 = vlaneseq
    %v400 = vshrl.u32 %v399, 7
    %v401 = vsub.s32 %v398, %v400
    %v402 = vrot.slane %v371, %v401
    %vm403 = vcmask 195712
    %v404 = vsel %vm403, %v402, %v397
    %v405 = vadd.s32 %v78, 4294967272
    %v406 = vlaneseq
    %v407 = vshrl.u32 %v406, 7
    %v408 = vsub.s32 %v405, %v407
    %v409 = vrot.slane %v374, %v408
    %vm410 = vcmask 261312
    %v411 = vsel %vm410, %v409, %v404
    %v412 = vlaneseq
    %v413 = vshrl.u32 %v412, 7
    %v414 = vsub.s32 %v78, %v413
    %v415 = vrot.slane %v377, %v414
    %v416 = vlaneseq
    %v417 = vshrl.u32 %v416, 7
    %v418 = vsub.s32 %v391, %v417
    %v419 = vrot.slane %v380, %v418
    %v420 = vsel %vm396, %v419, %v415
    %v421 = vlaneseq
    %v422 = vshrl.u32 %v421, 7
    %v423 = vsub.s32 %v398, %v422
    %v424 = vrot.slane %v383, %v423
    %v425 = vsel %vm403, %v424, %v420
    %v426 = vlaneseq
    %v427 = vshrl.u32 %v426, 7
    %v428 = vsub.s32 %v405, %v427
    %v429 = vrot.slane %v386, %v428
    %v430 = vsel %vm410, %v429, %v425
    %v431 = vsel %vm87, %v430, %v411
    %v432 = vpack.c.b16 %v431, %v431
    %v437 = vunpack.c.l.b16 %v347
    %v438 = vunpack.c.l.b16 %v348
    %v439 = vunpack.c.l.b16 %v349
    %v440 = vunpack.c.l.b16 %v350
    %v441 = vpack.c.b16 %v438, %v437
    %v442 = vpack.c.b16 %v440, %v439
    %v446 = vsel %vm51, %v432, 0
    %448 = vmatprep.subr.bf16.mxu0 0
    %449 = vmatpush1.bf16.msra.mxu0 0
    %450 = vmatprep.subr.bf16.mxu0 0
    %451 = vmatpush1.bf16.msra.mxu0 0
    %452 = vmatprep.subr.bf16.mxu0 0
    %453 = vmatpush1.bf16.msra.mxu0 0
    %454 = vmatprep.subr.bf16.mxu0 0
    %455 = vmatpush1.bf16.msra.mxu0 0
    %456 = vmatprep.subr.bf16.mxu0 0
    %457 = vmatpush1.bf16.msra.mxu0 0
    %458 = vmatprep.subr.bf16.mxu0 0
    %459 = vmatpush1.bf16.msra.mxu0 0
    %460 = vmatprep.subr.bf16.mxu0 0
    %461 = vmatpush1.bf16.msra.mxu0 %v442
    %462 = vmatprep.subr.bf16.mxu0 0
    %463 = vmatpush1.bf16.msra.mxu0 %v441
    %464 = vmatprep.subr.bf16.mxu0 0
    %465 = vmatpush2.bf16.msra.mxu0 0
    %466 = vmatprep.subr.bf16.mxu0 0
    %467 = vmatpush2.bf16.msra.mxu0 0
    %468 = vmatprep.subr.bf16.mxu0 0
    %469 = vmatpush2.bf16.msra.mxu0 0
    %470 = vmatprep.subr.bf16.mxu0 0
    %471 = vmatpush2.bf16.msra.mxu0 0
    %472 = vmatprep.subr.bf16.mxu0 0
    %473 = vmatpush2.bf16.msra.mxu0 0
    %474 = vmatprep.subr.bf16.mxu0 0
    %475 = vmatpush2.bf16.msra.mxu0 0
    %476 = vmatprep.subr.bf16.mxu0 0
    %477 = vmatpush2.bf16.msra.mxu0 0
    %478 = vmatprep.subr.bf16.mxu0 0
    %479 = vmatpush2.bf16.msra.mxu0 0
    %480 = vmatprep.mubr.bf16.mxu0 0
    %481 = vmatmul.mubr.bf16.gmra.mxu0 %v446
    %v482 = vpop.f32.mrf.mxu0
    %v483 = vadd.f32 0.0, %v482
    %v484 = vpop.f32.mrf.mxu0
    %v485 = vpop.f32.mrf.mxu0
    %v486 = vpop.f32.mrf.mxu0
    %487 = vdwg.mxu0
    %v492 = vunpack.c.l.b16 %v279
    %v493 = vunpack.c.h.b16 %v279
    %v494 = vunpack.c.l.b16 %v280
    %v495 = vunpack.c.h.b16 %v280
    %v496 = vunpack.c.l.b16 %v281
    %v497 = vunpack.c.h.b16 %v281
    %v498 = vunpack.c.l.b16 %v282
    %v499 = vunpack.c.h.b16 %v282
    %500 = vset.pattern.permute.xlu0 0
    %501 = vperm.xlu0 %500, %v492
    %v502 = vpop.permute.xlu0 %501
    %503 = vset.pattern.permute.xlu0 0
    %504 = vperm.xlu0 %503, %v493
    %v505 = vpop.permute.xlu0 %504
    %506 = vset.pattern.permute.xlu0 0
    %507 = vperm.xlu0 %506, %v494
    %v508 = vpop.permute.xlu0 %507
    %509 = vset.pattern.permute.xlu0 0
    %510 = vperm.xlu0 %509, %v495
    %v511 = vpop.permute.xlu0 %510
    %512 = vset.pattern.permute.xlu0 0
    %513 = vperm.xlu0 %512, %v496
    %v514 = vpop.permute.xlu0 %513
    %515 = vset.pattern.permute.xlu0 0
    %516 = vperm.xlu0 %515, %v497
    %v517 = vpop.permute.xlu0 %516
    %518 = vset.pattern.permute.xlu0 0
    %519 = vperm.xlu0 %518, %v498
    %v520 = vpop.permute.xlu0 %519
    %521 = vset.pattern.permute.xlu0 0
    %522 = vperm.xlu0 %521, %v499
    %v523 = vpop.permute.xlu0 %522
    %v524 = vlaneseq
    %v525 = vshrl.u32 %v524, 7
    %v526 = vsub.s32 %v78, %v525
    %v527 = vrot.slane %v502, %v526
    %v528 = vlaneseq
    %v529 = vshrl.u32 %v528, 7
    %v530 = vsub.s32 %v391, %v529
    %v531 = vrot.slane %v505, %v530
    %v532 = vsel %vm396, %v531, %v527
    %v533 = vlaneseq
    %v534 = vshrl.u32 %v533, 7
    %v535 = vsub.s32 %v398, %v534
    %v536 = vrot.slane %v508, %v535
    %v537 = vsel %vm403, %v536, %v532
    %v538 = vlaneseq
    %v539 = vshrl.u32 %v538, 7
    %v540 = vsub.s32 %v405, %v539
    %v541 = vrot.slane %v511, %v540
    %v542 = vsel %vm410, %v541, %v537
    %v543 = vlaneseq
    %v544 = vshrl.u32 %v543, 7
    %v545 = vsub.s32 %v78, %v544
    %v546 = vrot.slane %v514, %v545
    %v547 = vlaneseq
    %v548 = vshrl.u32 %v547, 7
    %v549 = vsub.s32 %v391, %v548
    %v550 = vrot.slane %v517, %v549
    %v551 = vsel %vm396, %v550, %v546
    %v552 = vlaneseq
    %v553 = vshrl.u32 %v552, 7
    %v554 = vsub.s32 %v398, %v553
    %v555 = vrot.slane %v520, %v554
    %v556 = vsel %vm403, %v555, %v551
    %v557 = vlaneseq
    %v558 = vshrl.u32 %v557, 7
    %v559 = vsub.s32 %v405, %v558
    %v560 = vrot.slane %v523, %v559
    %v561 = vsel %vm410, %v560, %v556
    %v562 = vsel %vm87, %v561, %v542
    %v563 = vpack.c.b16 %v562, %v562
    %v568 = vunpack.c.l.b16 %v343
    %v569 = vunpack.c.l.b16 %v344
    %v570 = vunpack.c.l.b16 %v345
    %v571 = vunpack.c.l.b16 %v346
    %v572 = vpack.c.b16 %v569, %v568
    %v573 = vpack.c.b16 %v571, %v570
    %v577 = vsel %vm51, %v563, 0
    %579 = vmatprep.subr.bf16.mxu0 0
    %580 = vmatpush1.bf16.msra.mxu0 0
    %581 = vmatprep.subr.bf16.mxu0 0
    %582 = vmatpush1.bf16.msra.mxu0 0
    %583 = vmatprep.subr.bf16.mxu0 0
    %584 = vmatpush1.bf16.msra.mxu0 0
    %585 = vmatprep.subr.bf16.mxu0 0
    %586 = vmatpush1.bf16.msra.mxu0 0
    %587 = vmatprep.subr.bf16.mxu0 0
    %588 = vmatpush1.bf16.msra.mxu0 0
    %589 = vmatprep.subr.bf16.mxu0 0
    %590 = vmatpush1.bf16.msra.mxu0 0
    %591 = vmatprep.subr.bf16.mxu0 0
    %592 = vmatpush1.bf16.msra.mxu0 %v573
    %593 = vmatprep.subr.bf16.mxu0 0
    %594 = vmatpush1.bf16.msra.mxu0 %v572
    %595 = vmatprep.subr.bf16.mxu0 0
    %596 = vmatpush2.bf16.msra.mxu0 0
    %597 = vmatprep.subr.bf16.mxu0 0
    %598 = vmatpush2.bf16.msra.mxu0 0
    %599 = vmatprep.subr.bf16.mxu0 0
    %600 = vmatpush2.bf16.msra.mxu0 0
    %601 = vmatprep.subr.bf16.mxu0 0
    %602 = vmatpush2.bf16.msra.mxu0 0
    %603 = vmatprep.subr.bf16.mxu0 0
    %604 = vmatpush2.bf16.msra.mxu0 0
    %605 = vmatprep.subr.bf16.mxu0 0
    %606 = vmatpush2.bf16.msra.mxu0 0
    %607 = vmatprep.subr.bf16.mxu0 0
    %608 = vmatpush2.bf16.msra.mxu0 0
    %609 = vmatprep.subr.bf16.mxu0 0
    %610 = vmatpush2.bf16.msra.mxu0 0
    %611 = vmatprep.mubr.bf16.mxu0 0
    %612 = vmatmul.mubr.bf16.gmra.mxu0 %v577
    %v613 = vpop.f32.mrf.mxu0
    %v614 = vadd.f32 %v483, %v613
    %v615 = vpop.f32.mrf.mxu0
    %v616 = vpop.f32.mrf.mxu0
    %v617 = vpop.f32.mrf.mxu0
    %618 = vdwg.mxu0
    %v619 = vld [vmem:[%s5] sm:$0x1]
    %v621 = vlaneseq
    %v622 = vshrl.u32 %v621, 7
    %v623 = vsub.s32 0, %v622
    %v624 = vrot.slane %v619, %v623
    %v626 = vadd.f32 %v614, %v624
    %v627 = vmax.f32 %v626, 0.0
    %v628 = vpack.c.bf16 %v627, %v627
    %v629 = vld [vmem:[%s6] sm:$0xf]
    %v630 = vld [vmem:[%s6 + $0x4] sm:$0xf]
    %v631 = vld [vmem:[%s6 + $0x8] sm:$0xf]
    %v632 = vld [vmem:[%s6 + $0xc] sm:$0xf]
    %v633 = vld [vmem:[%s7] sm:$0x1]
    %v635 = vlaneseq
    %v636 = vshrl.u32 %v635, 7
    %v637 = vsub.s32 0, %v636
    %v638 = vrot.slane %v633, %v637
    %v644 = vunpack.c.l.b16 %v629
    %v645 = vunpack.c.l.b16 %v630
    %v646 = vunpack.c.l.b16 %v631
    %v647 = vunpack.c.l.b16 %v632
    %v648 = vpack.c.b16 %v645, %v644
    %v649 = vpack.c.b16 %v647, %v646
    %v653 = vsel %vm51, %v628, 0
    %655 = vmatprep.subr.bf16.mxu0 0
    %656 = vmatpush1.bf16.msra.mxu0 0
    %657 = vmatprep.subr.bf16.mxu0 0
    %658 = vmatpush1.bf16.msra.mxu0 0
    %659 = vmatprep.subr.bf16.mxu0 0
    %660 = vmatpush1.bf16.msra.mxu0 0
    %661 = vmatprep.subr.bf16.mxu0 0
    %662 = vmatpush1.bf16.msra.mxu0 0
    %663 = vmatprep.subr.bf16.mxu0 0
    %664 = vmatpush1.bf16.msra.mxu0 0
    %665 = vmatprep.subr.bf16.mxu0 0
    %666 = vmatpush1.bf16.msra.mxu0 0
    %667 = vmatprep.subr.bf16.mxu0 0
    %668 = vmatpush1.bf16.msra.mxu0 %v649
    %669 = vmatprep.subr.bf16.mxu0 0
    %670 = vmatpush1.bf16.msra.mxu0 %v648
    %671 = vmatprep.subr.bf16.mxu0 0
    %672 = vmatpush2.bf16.msra.mxu0 0
    %673 = vmatprep.subr.bf16.mxu0 0
    %674 = vmatpush2.bf16.msra.mxu0 0
    %675 = vmatprep.subr.bf16.mxu0 0
    %676 = vmatpush2.bf16.msra.mxu0 0
    %677 = vmatprep.subr.bf16.mxu0 0
    %678 = vmatpush2.bf16.msra.mxu0 0
    %679 = vmatprep.subr.bf16.mxu0 0
    %680 = vmatpush2.bf16.msra.mxu0 0
    %681 = vmatprep.subr.bf16.mxu0 0
    %682 = vmatpush2.bf16.msra.mxu0 0
    %683 = vmatprep.subr.bf16.mxu0 0
    %684 = vmatpush2.bf16.msra.mxu0 0
    %685 = vmatprep.subr.bf16.mxu0 0
    %686 = vmatpush2.bf16.msra.mxu0 0
    %687 = vmatprep.mubr.bf16.mxu0 0
    %688 = vmatmul.mubr.bf16.gmra.mxu0 %v653
    %v689 = vpop.f32.mrf.mxu0
    %v690 = vadd.f32 %v638, %v689
    %v691 = vpop.f32.mrf.mxu0
    %v692 = vpop.f32.mrf.mxu0
    %v693 = vpop.f32.mrf.mxu0
    %694 = vdwg.mxu0
    %vm695 = vcmask 123904
    %v696 = vsel %vm695, %v690, -inf
    %697 = vmax.xlane.f32.xlu0 %v696
    %v698 = vpop.xlane.xlu0 %697
    %v699 = vsub.f32 %v690, %v698
    %v700 = vmul.f32 %v699, 1.442695
    %v701 = vpow.pop %v700
    %v702 = vsel %vm695, %v701, 0.0
    %703 = vadd.xlane.f32.xlu0 %v702
    %v704 = vpop.xlane.xlu0 %703
    %v705 = vlog2.pop %v704
    %v706 = vmul.f32 %v705, 0.6931472
    %v707 = vadd.f32 %v698, %v706
    %v708 = vsub.f32 %v690, %v707
    %709 = vst.msk [vmem:[#allocation3] sm:$0x3] %vm695, %v708
    // Predicated region
    $region34: #{tpu_custom_call.1} parent=1 // pred_check
      _
    $region35: #{tpu_custom_call.1} parent=1 // pred_check_branch
      %711 = sbr.rel (0) target = $region37
    $region36: #{tpu_custom_call.1} parent=1 // pred_region
      %s713 = ssub.s32 32, 32
      %714 = vsyncadd [#allocation4], %s713
      %s716 = sshll.u32 [#allocation3], 4
      %s717 = int_to_ptr.vmem [resolvable:$true] %s716
      %719 = dma.vmem_to_hbm [thread:$0]  %s717, 32, %s8, [#allocation4]
    $region37: #{tpu_custom_call.1} parent=1 // pred_fallthru
      _
    // Predicated region
    $region38: #{tpu_custom_call.1} parent=1 // pred_check
      _
    $region39: #{tpu_custom_call.1} parent=1 // pred_check_branch
      %721 = sbr.rel (0) target = $region41
    $region40: #{tpu_custom_call.1} parent=1 // pred_region
      %722 = dma.done [#allocation4], 32
    $region41: #{tpu_custom_call.1} parent=1 // pred_fallthru
      _
    %723 = vsyncpa [#allocation4], 1

</llo_original>
